<compile_context>
chip_gen: v7x
topology: tpu7x:2x2x1
jax: 0.10.0
libtpu: 0.0.40
codegen_flags: <defaults>
</compile_context>

<pallas_src>
import functools

import jax
import jax.numpy as jnp
from jax.experimental import pallas as pl
from jax.experimental.pallas import tpu as pltpu


def _round_up(x: int, m: int) -> int:
    return (x + m - 1) // m * m


def _device_kind() -> str:
    try:
        return jax.devices()[0].device_kind.lower()
    except Exception:
        return ""


def _tpu_defaults():
    """Per-TPU-generation tiling / dtype defaults."""
    kind = _device_kind()
    if "v6" in kind:
        # 128 MiB VMEM, bf16 VALU/MXU: big tiles + bf16 one-hot.
        return dict(n_tile=1024, p_tile=4096, vmem=64 * 1024 * 1024,
                    dot_dtype=jnp.bfloat16, ncores=1)
    if "v7" in kind:
        # 64 MiB VMEM per TensorCore, 2 TCs: conservative tiles, bf16 one-hot,
        # and make sure the "parallel" N axis has >= 2 tiles.
        return dict(n_tile=512, p_tile=2048, vmem=40 * 1024 * 1024,
                    dot_dtype=jnp.bfloat16, ncores=2)
    # v5e (and unknown): no bf16 VALU, 16 MiB default scoped VMEM -> keep f32,
    # smaller P tiles, modestly raised VMEM limit.
    return dict(n_tile=512, p_tile=1024, vmem=24 * 1024 * 1024,
                dot_dtype=jnp.float32, ncores=1)


# ----------------------------- Pallas kernel --------------------------------
def _uv_gather_kernel(idx_ref, w_ref, uv_ref, out_ref, *scratch,
                      p_tile, dot_dtype, uv_resident):
    # idx_ref: (K, NT) int32   flat indices into [0, P)
    # w_ref:   (K, NT) f32     per-corner blend weights
    # uv_ref:  (R, PT) or (R, P_pad)  rows = flattened (batch*channel)
    # out_ref: (R, NT)         output tile (resident across the P grid axis)
    # scratch: optional (R, NT) f32 accumulator (only if out dtype != f32)
    p = pl.program_id(1)
    acc_ref = scratch[0] if scratch else out_ref

    @pl.when(p == 0)
    def _init():
        acc_ref[...] = jnp.zeros_like(acc_ref)

    K, _ = idx_ref.shape

    if uv_resident:
        # Whole uvmap is resident in VMEM; slice the current P tile.
        off = pl.multiple_of(p * p_tile, p_tile)
        uv_tile = uv_ref[:, pl.ds(off, p_tile)]
    else:
        uv_tile = uv_ref[...]
    uv_tile = uv_tile.astype(dot_dtype)

    piota = jax.lax.broadcasted_iota(jnp.int32, (p_tile, 1), 0)      # (PT, 1)
    idx_local = idx_ref[...] - p * p_tile                            # (K, NT)
    w_all = w_ref[...]                                               # (K, NT)

    # K boolean one-hot matmuls + tiny f32 weight epilogue.  Only one (PT, NT)
    # one-hot is live at a time; the full-tile VALU work is one compare +
    # convert per corner (the MXU has huge slack at 8 result rows).
    part = None
    for k in range(K):                                               # K is 1 or 4
        onehot = (piota == idx_local[k:k + 1, :]).astype(dot_dtype)  # (PT, NT)
        gk = jnp.dot(uv_tile, onehot,
                     preferred_element_type=jnp.float32)             # (R, NT)
        contrib = w_all[k:k + 1, :] * gk
        part = contrib if part is None else part + contrib
    acc_ref[...] += part

    if scratch:
        @pl.when(p == pl.num_programs(1) - 1)
        def _finish():
            out_ref[...] = acc_ref[...].astype(out_ref.dtype)


def _pallas_gather(uvmap_flat, idx, w, *, n_tile=None, p_tile=None,
                   dot_dtype=None, uv_resident=None, vmem_limit_bytes=None,
                   uv_resident_bytes_limit=4 * 1024 * 1024):
    """out[b, c, n] = sum_k w[k, n] * uvmap_flat[b, c, idx[k, n]]."""
    d = _tpu_defaults()
    auto_n = n_tile is None
    n_tile = d["n_tile"] if n_tile is None else n_tile
    p_tile = d["p_tile"] if p_tile is None else p_tile
    dot_dtype = d["dot_dtype"] if dot_dtype is None else dot_dtype
    vmem_limit_bytes = d["vmem"] if vmem_limit_bytes is None else vmem_limit_bytes

    B, C, P = uvmap_flat.shape
    K, N = idx.shape
    R = B * C

    # Pad rows to x8 (sublane) and N / P tiles to x128 (lane): unmasked
    # lane-dense vector stores and legal BlockSpecs.
    R_pad = _round_up(max(R, 8), 8)
    n_base = _round_up(N, 128)
    n_tile = max(128, min(n_tile, n_base))
    if auto_n and d["ncores"] >= 2 and n_base >= 256:
        # >= 2 N tiles so both TensorCores get work on the "parallel" axis.
        n_tile = min(n_tile, max(128, (n_base // 2) // 128 * 128))
    p_tile = max(128, min(p_tile, _round_up(P, 128)))
    N_pad = _round_up(N, n_tile)
    P_pad = _round_up(P, p_tile)

    uv2d = uvmap_flat.reshape(R, P)
    if (R_pad, P_pad) != (R, P):
        uv2d = jnp.pad(uv2d, ((0, R_pad - R), (0, P_pad - P)))
    if N_pad != N:
        # Padded columns: index 0 with weight 0 -> contribute nothing.
        idx = jnp.pad(idx, ((0, 0), (0, N_pad - N)))
        w = jnp.pad(w, ((0, 0), (0, N_pad - N)))
    idx = idx.astype(jnp.int32)
    w = w.astype(jnp.float32)

    if uv_resident is None:
        uv_bytes = R_pad * P_pad * jnp.dtype(uvmap_flat.dtype).itemsize
        uv_resident = uv_bytes <= uv_resident_bytes_limit

    out_dtype = uvmap_flat.dtype
    use_scratch = jnp.dtype(out_dtype) != jnp.dtype(jnp.float32)
    scratch_shapes = ([pltpu.VMEM((R_pad, n_tile), jnp.float32)]
                      if use_scratch else [])

    if uv_resident:
        # Constant index map: the uvmap is DMA'd into VMEM exactly once.
        uv_spec = pl.BlockSpec((R_pad, P_pad), lambda n, p: (0, 0))
    else:
        uv_spec = pl.BlockSpec((R_pad, p_tile), lambda n, p: (0, p))

    kernel = functools.partial(_uv_gather_kernel, p_tile=p_tile,
                               dot_dtype=dot_dtype, uv_resident=uv_resident)

    grid = (N_pad // n_tile, P_pad // p_tile)

    out = pl.pallas_call(
        kernel,
        out_shape=jax.ShapeDtypeStruct((R_pad, N_pad), out_dtype),
        grid=grid,
        in_specs=[
            pl.BlockSpec((K, n_tile), lambda n, p: (0, n)),        # idx
            pl.BlockSpec((K, n_tile), lambda n, p: (0, n)),        # w
            uv_spec,                                               # uvmap rows
        ],
        out_specs=pl.BlockSpec((R_pad, n_tile), lambda n, p: (0, n)),
        scratch_shapes=scratch_shapes,
        compiler_params=pltpu.CompilerParams(
            dimension_semantics=("parallel", "arbitrary"),
            vmem_limit_bytes=vmem_limit_bytes),
    )(idx, w, uv2d)

    return out[:R, :N].reshape(B, C, N)


# ----------------------------- Module wrapper --------------------------------
class Uv2AttrPallas:
    """JAX/Pallas port of Uv2Attr (forward pass)."""

    def __init__(self, uv_coords, faces_packed=None, size=128):
        # uv_coords: (1, N, 2) float32
        uv_min = uv_coords.min(axis=1)                 # (1, 2)
        uv_max = uv_coords.max(axis=1)                 # (1, 2)
        uv = (uv_coords - uv_min) / (uv_max - uv_min)  # (1, N, 2)
        x = uv[:, :, 0]
        y = uv[:, :, 1]
        self.x = x * (size - 1)                        # (1, N)
        self.y = size - 1 - y * (size - 1)             # (1, N)
        self.faces_packed = faces_packed

    @staticmethod
    def _flat_idx(x, y, H, W):
        x = jnp.clip(x, 0, W - 1)
        y = jnp.clip(y, 0, H - 1)
        return (W * y + x).astype(jnp.int32)           # (1, N)

    def _nearest_idx_w(self, H, W):
        x = jnp.round(self.x)
        y = jnp.round(self.y)
        idx = self._flat_idx(x, y, H, W)               # (1, N)
        w = jnp.ones_like(idx, dtype=jnp.float32)      # (1, N)
        return idx, w

    def _bilinear_idx_w(self, H, W):
        x, y = self.x, self.y
        x0 = jnp.floor(x)
        x1 = x0 + 1
        y0 = jnp.floor(y)
        y1 = y0 + 1
        ia = self._flat_idx(x0, y0, H, W)
        ib = self._flat_idx(x0, y1, H, W)
        ic = self._flat_idx(x1, y0, H, W)
        idd = self._flat_idx(x1, y1, H, W)
        wa = (x1 - x) * (y1 - y)
        wb = (x1 - x) * (y - y0)
        wc = (x - x0) * (y1 - y)
        wd = (x - x0) * (y - y0)
        idx = jnp.concatenate([ia, ib, ic, idd], axis=0)        # (4, N)
        w = jnp.concatenate([wa, wb, wc, wd], axis=0).astype(jnp.float32)
        return idx, w

    def __call__(self, batch_uv, bilinear=False, *, n_tile=None, p_tile=None,
                 dot_dtype=None, uv_resident=None):
        # batch_uv: (B, C, H, W) NCHW, like the torch module.
        # NOTE: like the torch module, x/y were scaled with the constructor's
        # `size`; H/W here are assumed to match it (no guard, mirrors torch).
        B, C, H, W = batch_uv.shape
        uvmap_flat = batch_uv.reshape(B, C, H * W)
        if bilinear:
            idx, w = self._bilinear_idx_w(H, W)
        else:
            idx, w = self._nearest_idx_w(H, W)
        return _pallas_gather(uvmap_flat, idx, w, n_tile=n_tile, p_tile=p_tile,
                              dot_dtype=dot_dtype,
                              uv_resident=uv_resident)           # (B, C, N)


# ----------------------- pure-JAX reference (torch semantics) ---------------
def _ref_index_vert_attr(x, y, uvmap):
    B, C, H, W = uvmap.shape
    x = jnp.clip(x, 0, W - 1)
    y = jnp.clip(y, 0, H - 1)
    idx = (W * y + x).astype(jnp.int32)                # (1, N)
    flat = uvmap.reshape(B, C, H * W)
    idxb = jnp.broadcast_to(idx[:, None, :], (B, C, idx.shape[1]))
    return jnp.take_along_axis(flat, idxb, axis=2)


def _ref_forward(mod, uvmap, bilinear=False):
    if not bilinear:
        return _ref_index_vert_attr(jnp.round(mod.x), jnp.round(mod.y), uvmap)
    x, y = mod.x, mod.y
    x0 = jnp.floor(x); x1 = x0 + 1
    y0 = jnp.floor(y); y1 = y0 + 1
    ia = _ref_index_vert_attr(x0, y0, uvmap)
    ib = _ref_index_vert_attr(x0, y1, uvmap)
    ic = _ref_index_vert_attr(x1, y0, uvmap)
    idd = _ref_index_vert_attr(x1, y1, uvmap)
    wa = ((x1 - x) * (y1 - y))[:, None, :]
    wb = ((x1 - x) * (y - y0))[:, None, :]
    wc = ((x - x0) * (y1 - y))[:, None, :]
    wd = ((x - x0) * (y - y0))[:, None, :]
    return wa * ia + wb * ib + wc * ic + wd * idd


if __name__ == "__main__":
    key = jax.random.PRNGKey(0)
    k_uv, k_map1, k_map2, k_uv2, k_map3 = jax.random.split(key, 5)

    # Tolerances: the device-default path uses bf16 one-hot/uvmap on v6e/v7x
    # (f32 weights + f32 accumulation), so relax tolerance for that path only.
    auto_bf16 = _tpu_defaults()["dot_dtype"] == jnp.bfloat16
    loose = (dict(atol=3e-2, rtol=3e-2) if auto_bf16
             else dict(atol=1e-5, rtol=1e-5))
    strict = dict(atol=1e-5, rtol=1e-5)

    # ---------------- small shapes, single tile ------------------------
    SIZE = 16          # uv-map spatial size (H = W = SIZE), P = 256
    N_VERTS = 8        # number of uv coordinates (pads to 128 lanes)
    B = 2

    uv_coords = jax.random.uniform(k_uv, (1, N_VERTS, 2), dtype=jnp.float32)
    mod = Uv2AttrPallas(uv_coords, size=SIZE)

    # nearest (default forward path), C = 4
    batch_uv = jax.random.normal(k_map1, (B, 4, SIZE, SIZE), dtype=jnp.float32)
    ref_nearest = _ref_forward(mod, batch_uv, bilinear=False)
    out_nearest = jax.block_until_ready(
        mod(batch_uv, bilinear=False, dot_dtype=jnp.float32))
    assert out_nearest.shape == (B, 4, N_VERTS)
    assert jnp.allclose(out_nearest, ref_nearest, **strict)
    out_nearest_auto = jax.block_until_ready(mod(batch_uv, bilinear=False))
    assert jnp.allclose(out_nearest_auto, ref_nearest, **loose)

    # bilinear path (torch module hardcodes 3 channels there), C = 3
    batch_uv3 = jax.random.normal(k_map2, (B, 3, SIZE, SIZE), dtype=jnp.float32)
    ref_bilin = _ref_forward(mod, batch_uv3, bilinear=True)
    out_bilin = jax.block_until_ready(
        mod(batch_uv3, bilinear=True, dot_dtype=jnp.float32))
    assert out_bilin.shape == (B, 3, N_VERTS)
    assert jnp.allclose(out_bilin, ref_bilin, **strict)
    out_bilin_auto = jax.block_until_ready(mod(batch_uv3, bilinear=True))
    assert jnp.allclose(out_bilin_auto, ref_bilin, **loose)

    # -------- multi-tile: N tiling, P reduction, padding, both uv paths -----
    SIZE2 = 32         # P = 1024 -> 4 P-tiles of 256
    N_VERTS2 = 200     # pads to 256 -> 2 N-tiles of 128
    uv_coords2 = jax.random.uniform(k_uv2, (1, N_VERTS2, 2), dtype=jnp.float32)
    mod2 = Uv2AttrPallas(uv_coords2, size=SIZE2)
    batch_uv_mt = jax.random.normal(k_map3, (B, 3, SIZE2, SIZE2),
                                    dtype=jnp.float32)

    ref_mt = _ref_forward(mod2, batch_uv_mt, bilinear=True)
    out_mt = jax.block_until_ready(
        mod2(batch_uv_mt, bilinear=True, n_tile=128, p_tile=256,
             dot_dtype=jnp.float32))
    assert out_mt.shape == (B, 3, N_VERTS2)
    assert jnp.allclose(out_mt, ref_mt, **strict)

    # non-resident uvmap path (tiled P DMA)
    out_mt_t = jax.block_until_ready(
        mod2(batch_uv_mt, bilinear=True, n_tile=128, p_tile=256,
             dot_dtype=jnp.float32, uv_resident=False))
    assert jnp.allclose(out_mt_t, ref_mt, **strict)

    ref_mt_n = _ref_forward(mod2, batch_uv_mt, bilinear=False)
    out_mt_n = jax.block_until_ready(
        mod2(batch_uv_mt, bilinear=False, n_tile=128, p_tile=256,
             dot_dtype=jnp.float32))
    assert jnp.allclose(out_mt_n, ref_mt_n, **strict)

    # device-default tiles + dtype on the bigger problem
    out_mt_auto = jax.block_until_ready(mod2(batch_uv_mt, bilinear=True))
    assert jnp.allclose(out_mt_auto, ref_mt, **loose)

    print("KERNEL_OK")
</pallas_src>

<mosaic_0001>
module attributes {stable_mosaic.version = 11 : i64} {
  func.func @_uv_gather_kernel(%arg0: i32, %arg1: i32, %arg2: memref<1x128xi32, #tpu.memory_space<vmem>>, %arg3: memref<1x128xf32, #tpu.memory_space<vmem>>, %arg4: memref<8x256xf32, #tpu.memory_space<vmem>>, %arg5: memref<8x128xf32, #tpu.memory_space<vmem>>) attributes {dimension_semantics = [#tpu.dimension_semantics<parallel>, #tpu.dimension_semantics<arbitrary>], iteration_bounds = array<i64: 1, 1>, scalar_prefetch = 0 : i64, scratch_operands = 0 : i64, tpu.core_type = #tpu.core_type<tc>, window_params = [{transform_indices = @transform_0, window_bounds = array<i64: 1, 128>}, {transform_indices = @transform_1, window_bounds = array<i64: 1, 128>}, {pipeline_mode = #tpu.pipeline_mode<synchronous>, transform_indices = @transform_2, window_bounds = array<i64: 8, 256>}, {transform_indices = @transform_3, window_bounds = array<i64: 8, 128>}]} {
    %c0_i32 = arith.constant 0 : i32
    %0 = arith.cmpi eq, %arg1, %c0_i32 : i32
    %1 = arith.extui %0 : i1 to i32
    %c0_i32_0 = arith.constant 0 : i32
    %2 = arith.cmpi ne, %1, %c0_i32_0 : i32
    scf.if %2 {
      %cst_10 = arith.constant 0.000000e+00 : f32
      %24 = vector.broadcast %cst_10 : f32 to vector<8x128xf32>
      %c0_11 = arith.constant 0 : index
      %c0_12 = arith.constant 0 : index
      %25 = vector.load %arg5[%c0_11, %c0_12] : memref<8x128xf32, #tpu.memory_space<vmem>>, vector<8x128xf32>
      tpu.vector_store %arg5[%c0_11, %c0_12], %24 {strides = array<i32>} : memref<8x128xf32, #tpu.memory_space<vmem>>, vector<8x128xf32>,
    } else {
    }
    %c256_i32 = arith.constant 256 : i32
    %3 = arith.muli %arg1, %c256_i32 : i32
    %4 = tpu.assume_multiple %3, 256 : i32
    %c0 = arith.constant 0 : index
    %5 = arith.index_cast %4 : i32 to index
    %6 = vector.load %arg4[%c0, %5] : memref<8x256xf32, #tpu.memory_space<vmem>>, vector<8x256xf32>
    %7 = tpu.iota {dimensions = array<i32: 0>} : vector<256x1xi32>
    %c0_1 = arith.constant 0 : index
    %c0_2 = arith.constant 0 : index
    %8 = vector.load %arg2[%c0_1, %c0_2] : memref<1x128xi32, #tpu.memory_space<vmem>>, vector<1x128xi32>
    %c256_i32_3 = arith.constant 256 : i32
    %9 = arith.muli %arg1, %c256_i32_3 : i32
    %10 = vector.broadcast %9 : i32 to vector<1x128xi32>
    %11 = arith.subi %8, %10 : vector<1x128xi32>
    %c0_4 = arith.constant 0 : index
    %c0_5 = arith.constant 0 : index
    %12 = vector.load %arg3[%c0_4, %c0_5] : memref<1x128xf32, #tpu.memory_space<vmem>>, vector<1x128xf32>
    %13 = vector.broadcast %7 : vector<256x1xi32> to vector<256x128xi32>
    %14 = vector.broadcast %11 : vector<1x128xi32> to vector<256x128xi32>
    %15 = arith.cmpi eq, %13, %14 : vector<256x128xi32>
    %16 = arith.extui %15 : vector<256x128xi1> to vector<256x128xi32>
    %17 = arith.sitofp %16 : vector<256x128xi32> to vector<256x128xf32>
    %cst = arith.constant dense<0.000000e+00> : vector<8x128xf32>
    %18 = tpu.matmul %6, %17, %cst {dimension_numbers = #tpu.dot_dimension_numbers<[1], [0], [0], [1], [0, 0, 1, 1], [], []>} : vector<8x256xf32>, vector<256x128xf32>, vector<8x128xf32> -> vector<8x128xf32>
    %19 = vector.broadcast %12 : vector<1x128xf32> to vector<8x128xf32>
    %20 = arith.mulf %19, %18 : vector<8x128xf32>
    %c0_6 = arith.constant 0 : index
    %c0_7 = arith.constant 0 : index
    %21 = vector.load %arg5[%c0_6, %c0_7] : memref<8x128xf32, #tpu.memory_space<vmem>>, vector<8x128xf32>
    %22 = arith.addf %21, %20 : vector<8x128xf32>
    %c0_8 = arith.constant 0 : index
    %c0_9 = arith.constant 0 : index
    %23 = vector.load %arg5[%c0_8, %c0_9] : memref<8x128xf32, #tpu.memory_space<vmem>>, vector<8x128xf32>
    tpu.vector_store %arg5[%c0_8, %c0_9], %22 {strides = array<i32>} : memref<8x128xf32, #tpu.memory_space<vmem>>, vector<8x128xf32>,
    return
  }
  func.func @transform_0(%arg0: i32, %arg1: i32) -> (i32, i32) {
    %c0_i32 = arith.constant 0 : i32
    %c0_i32_0 = arith.constant 0 : i32
    return %c0_i32, %arg0 : i32, i32
  }
  func.func @transform_1(%arg0: i32, %arg1: i32) -> (i32, i32) {
    %c0_i32 = arith.constant 0 : i32
    %c0_i32_0 = arith.constant 0 : i32
    return %c0_i32, %arg0 : i32, i32
  }
  func.func @transform_2(%arg0: i32, %arg1: i32) -> (i32, i32) {
    %c0_i32 = arith.constant 0 : i32
    %c0_i32_0 = arith.constant 0 : i32
    %c0_i32_1 = arith.constant 0 : i32
    return %c0_i32, %c0_i32_0 : i32, i32
  }
  func.func @transform_3(%arg0: i32, %arg1: i32) -> (i32, i32) {
    %c0_i32 = arith.constant 0 : i32
    %c0_i32_0 = arith.constant 0 : i32
    return %c0_i32, %arg0 : i32, i32
  }
}

</mosaic_0001>

<llo_original>
// kernel: tpu_custom_call.1
$region0: #{tpu_custom_call.1}
  #allocation0 [shape = 'u32[]', space=smem, size = 0x4, offset = 0x4, fixed_abs, tag = 'smem constant byte address 0x4 - core index']
  #allocation1 [shape = 'u32[144,128]{1,0:T(1,128)}', space=vmem, size = 0x12000, scoped, tag = 'internal scratch']
  %s0 = inlined_call_operand.hbm [shape: s32[1,128], index: 0, kind: input, shape index: {}]
  %s1 = inlined_call_operand.vmem [shape: f32[1,128], index: 1, kind: input, shape index: {}]
  %s2 = inlined_call_operand.hbm [shape: f32[8,256], index: 2, kind: input, shape index: {}]
  %s3 = inlined_call_operand.hbm [shape: f32[8,128], index: 3, kind: output, shape index: {}]
  %s4 = sld [smem:[#allocation0]]
  $region34: #{tpu_custom_call.1} parent=0
    _
  %s6 = ssub.s32 1, %s4
  %s7 = scalar_select 0, %s6, %s4
  $region1: #{tpu_custom_call.1} parent=0
    #allocation2 [shape = 'u8[512]{0}', space=vmem, size = 0x400, scoped, tag = 'input window, operand 0, single buffered']
    #allocation3 [shape = 's32[1]{0}', space=sflag, size = 0x4, scoped, tag = 'scoped memory for tpu_custom_call.1']
    #allocation4 [shape = 's32[1]{0}', space=sflag, size = 0x4, scoped, tag = 'scoped memory for tpu_custom_call.1']
    #allocation5 [shape = 'u8[8192]{0}', space=vmem, size = 0x2000, scoped, tag = 'input window, operand 2, single buffered']
    #allocation6 [shape = 's32[1]{0}', space=sflag, size = 0x4, scoped, tag = 'scoped memory for tpu_custom_call.1']
    #allocation7 [shape = 'u8[4096]{0}', space=vmem, size = 0x1000, scoped, tag = 'output window, operand 0, single buffered']
    %8 = vsyncpa [#allocation3], 0
    %9 = vsyncpa [#allocation6], 0
    %10 = vsyncpa [#allocation4], 0
    // Predicated region
    $region2: #{tpu_custom_call.1} parent=1 // pred_check
      _
    $region3: #{tpu_custom_call.1} parent=1 // pred_check_branch
      %12 = sbr.rel (0) target = $region5
    $region4: #{tpu_custom_call.1} parent=1 // pred_region
      %s14 = ssub.s32 16, 16
      %15 = vsyncadd [#allocation3], %s14
      %s17 = sshll.u32 [#allocation2], 4
      %s18 = int_to_ptr.vmem [resolvable:$true] %s17
      %20 = dma.hbm_to_vmem [thread:$0]  %s0, 16, %s18, [#allocation3]
    $region5: #{tpu_custom_call.1} parent=1 // pred_fallthru
      _
    // Predicated region
    $region6: #{tpu_custom_call.1} parent=1 // pred_check
      _
    $region7: #{tpu_custom_call.1} parent=1 // pred_check_branch
      %22 = sbr.rel (0) target = $region9
    $region8: #{tpu_custom_call.1} parent=1 // pred_region
      _
    $region9: #{tpu_custom_call.1} parent=1 // pred_fallthru
      _
    // Predicated region
    $region10: #{tpu_custom_call.1} parent=1 // pred_check
      _
    $region11: #{tpu_custom_call.1} parent=1 // pred_check_branch
      %24 = sbr.rel (0) target = $region13
    $region12: #{tpu_custom_call.1} parent=1 // pred_region
      %s26 = ssub.s32 256, 256
      %27 = vsyncadd [#allocation6], %s26
      %s29 = sshll.u32 [#allocation5], 4
      %s30 = int_to_ptr.vmem [resolvable:$true] %s29
      %32 = dma.hbm_to_vmem [thread:$0]  %s2, 256, %s30, [#allocation6]
    $region13: #{tpu_custom_call.1} parent=1 // pred_fallthru
      _
    // Predicated region
    $region14: #{tpu_custom_call.1} parent=1 // pred_check
      _
    $region15: #{tpu_custom_call.1} parent=1 // pred_check_branch
      %34 = sbr.rel (0) target = $region17
    $region16: #{tpu_custom_call.1} parent=1 // pred_region
      %35 = dma.done [#allocation3], 16
    $region17: #{tpu_custom_call.1} parent=1 // pred_fallthru
      _
    // Predicated region
    $region18: #{tpu_custom_call.1} parent=1 // pred_check
      _
    $region19: #{tpu_custom_call.1} parent=1 // pred_check_branch
      %37 = sbr.rel (0) target = $region21
    $region20: #{tpu_custom_call.1} parent=1 // pred_region
      %38 = dma.done [#allocation6], 256
    $region21: #{tpu_custom_call.1} parent=1 // pred_fallthru
      _
    %p39 = scmp.eq.s32.totalorder 0, 0
    // Predicated region
    $region22: #{tpu_custom_call.1} parent=1 // pred_check
      %p40 = pneg %p39
    $region23: #{tpu_custom_call.1} parent=1 // pred_check_branch
      %42 = sbr.rel (%p40) target = $region25
    $region24: #{tpu_custom_call.1} parent=1 // pred_region
      %43 = vst [vmem:[#allocation7] sm:$0xff] 0.0
    $region25: #{tpu_custom_call.1} parent=1 // pred_fallthru
      _
    %s44 = smul.u32 0, 256
    %s45 = sshra.s32 %s44, 7
    %s46 = sand.u32 %s44, 127
    %s47 = smul.addr %s45, 8
    %s48 = scalar_lea.vmem [#allocation5], %s47
    %v49 = vld [vmem:[%s48] sm:$0xff]
    %v50 = vld [vmem:[%s48 + $0x8] sm:$0xff]
    %v51 = vlaneseq
    %v52 = vshrl.u32 %v51, 7
    %v53 = vadd.s32 %v52, 8
    %v54 = vadd.s32 %v52, 16
    %v55 = vadd.s32 %v52, 24
    %v56 = vadd.s32 %v52, 32
    %v57 = vadd.s32 %v52, 40
    %v58 = vadd.s32 %v52, 48
    %v59 = vadd.s32 %v52, 56
    %v60 = vadd.s32 %v52, 64
    %v61 = vadd.s32 %v52, 72
    %v62 = vadd.s32 %v52, 80
    %v63 = vadd.s32 %v52, 88
    %v64 = vadd.s32 %v52, 96
    %v65 = vadd.s32 %v52, 104
    %v66 = vadd.s32 %v52, 112
    %v67 = vadd.s32 %v52, 120
    %v68 = vadd.s32 %v52, 128
    %v69 = vadd.s32 %v52, 136
    %v70 = vadd.s32 %v52, 144
    %v71 = vadd.s32 %v52, 152
    %v72 = vadd.s32 %v52, 160
    %v73 = vadd.s32 %v52, 168
    %v74 = vadd.s32 %v52, 176
    %v75 = vadd.s32 %v52, 184
    %v76 = vadd.s32 %v52, 192
    %v77 = vadd.s32 %v52, 200
    %v78 = vadd.s32 %v52, 208
    %v79 = vadd.s32 %v52, 216
    %v80 = vadd.s32 %v52, 224
    %v81 = vadd.s32 %v52, 232
    %v82 = vadd.s32 %v52, 240
    %v83 = vadd.s32 %v52, 248
    %v84 = vld [vmem:[#allocation2] sm:$0x1]
    %v85 = vstv %s44
    %v86 = vsub.s32 %v84, %v85
    %v87 = vld [vmem:[%s1] sm:$0x1]
    %v88 = vlaneseq
    %v89 = vshrl.u32 %v88, 7
    %v90 = vsub.s32 0, %v89
    %v91 = vrot.slane %v86, %v90
    %vm92 = vcmp.eq.s32.totalorder %v52, %v91
    %vm93 = vcmp.eq.s32.totalorder %v53, %v91
    %vm94 = vcmp.eq.s32.totalorder %v54, %v91
    %vm95 = vcmp.eq.s32.totalorder %v55, %v91
    %vm96 = vcmp.eq.s32.totalorder %v56, %v91
    %vm97 = vcmp.eq.s32.totalorder %v57, %v91
    %vm98 = vcmp.eq.s32.totalorder %v58, %v91
    %vm99 = vcmp.eq.s32.totalorder %v59, %v91
    %vm100 = vcmp.eq.s32.totalorder %v60, %v91
    %vm101 = vcmp.eq.s32.totalorder %v61, %v91
    %vm102 = vcmp.eq.s32.totalorder %v62, %v91
    %vm103 = vcmp.eq.s32.totalorder %v63, %v91
    %vm104 = vcmp.eq.s32.totalorder %v64, %v91
    %vm105 = vcmp.eq.s32.totalorder %v65, %v91
    %vm106 = vcmp.eq.s32.totalorder %v66, %v91
    %vm107 = vcmp.eq.s32.totalorder %v67, %v91
    %vm108 = vcmp.eq.s32.totalorder %v68, %v91
    %vm109 = vcmp.eq.s32.totalorder %v69, %v91
    %vm110 = vcmp.eq.s32.totalorder %v70, %v91
    %vm111 = vcmp.eq.s32.totalorder %v71, %v91
    %vm112 = vcmp.eq.s32.totalorder %v72, %v91
    %vm113 = vcmp.eq.s32.totalorder %v73, %v91
    %vm114 = vcmp.eq.s32.totalorder %v74, %v91
    %vm115 = vcmp.eq.s32.totalorder %v75, %v91
    %vm116 = vcmp.eq.s32.totalorder %v76, %v91
    %vm117 = vcmp.eq.s32.totalorder %v77, %v91
    %vm118 = vcmp.eq.s32.totalorder %v78, %v91
    %vm119 = vcmp.eq.s32.totalorder %v79, %v91
    %vm120 = vcmp.eq.s32.totalorder %v80, %v91
    %vm121 = vcmp.eq.s32.totalorder %v81, %v91
    %vm122 = vcmp.eq.s32.totalorder %v82, %v91
    %vm123 = vcmp.eq.s32.totalorder %v83, %v91
    %v124 = vsel %vm92, 1, 0
    %v125 = vsel %vm93, 1, 0
    %v126 = vsel %vm94, 1, 0
    %v127 = vsel %vm95, 1, 0
    %v128 = vsel %vm96, 1, 0
    %v129 = vsel %vm97, 1, 0
    %v130 = vsel %vm98, 1, 0
    %v131 = vsel %vm99, 1, 0
    %v132 = vsel %vm100, 1, 0
    %v133 = vsel %vm101, 1, 0
    %v134 = vsel %vm102, 1, 0
    %v135 = vsel %vm103, 1, 0
    %v136 = vsel %vm104, 1, 0
    %v137 = vsel %vm105, 1, 0
    %v138 = vsel %vm106, 1, 0
    %v139 = vsel %vm107, 1, 0
    %v140 = vsel %vm108, 1, 0
    %v141 = vsel %vm109, 1, 0
    %v142 = vsel %vm110, 1, 0
    %v143 = vsel %vm111, 1, 0
    %v144 = vsel %vm112, 1, 0
    %v145 = vsel %vm113, 1, 0
    %v146 = vsel %vm114, 1, 0
    %v147 = vsel %vm115, 1, 0
    %v148 = vsel %vm116, 1, 0
    %v149 = vsel %vm117, 1, 0
    %v150 = vsel %vm118, 1, 0
    %v151 = vsel %vm119, 1, 0
    %v152 = vsel %vm120, 1, 0
    %v153 = vsel %vm121, 1, 0
    %v154 = vsel %vm122, 1, 0
    %v155 = vsel %vm123, 1, 0
    %v156 = vcvt.s32.f32 %v124
    %v157 = vcvt.s32.f32 %v125
    %v158 = vcvt.s32.f32 %v126
    %v159 = vcvt.s32.f32 %v127
    %v160 = vcvt.s32.f32 %v128
    %v161 = vcvt.s32.f32 %v129
    %v162 = vcvt.s32.f32 %v130
    %v163 = vcvt.s32.f32 %v131
    %v164 = vcvt.s32.f32 %v132
    %v165 = vcvt.s32.f32 %v133
    %v166 = vcvt.s32.f32 %v134
    %v167 = vcvt.s32.f32 %v135
    %v168 = vcvt.s32.f32 %v136
    %v169 = vcvt.s32.f32 %v137
    %v170 = vcvt.s32.f32 %v138
    %v171 = vcvt.s32.f32 %v139
    %v172 = vcvt.s32.f32 %v140
    %v173 = vcvt.s32.f32 %v141
    %v174 = vcvt.s32.f32 %v142
    %v175 = vcvt.s32.f32 %v143
    %v176 = vcvt.s32.f32 %v144
    %v177 = vcvt.s32.f32 %v145
    %v178 = vcvt.s32.f32 %v146
    %v179 = vcvt.s32.f32 %v147
    %v180 = vcvt.s32.f32 %v148
    %v181 = vcvt.s32.f32 %v149
    %v182 = vcvt.s32.f32 %v150
    %v183 = vcvt.s32.f32 %v151
    %v184 = vcvt.s32.f32 %v152
    %v185 = vcvt.s32.f32 %v153
    %v186 = vcvt.s32.f32 %v154
    %v187 = vcvt.s32.f32 %v155
    %188 = vmatprep.subr.mxu0 0.0
    %189 = vmatpush1.msra.mxu0 %v156
    %190 = vmatprep.subr.mxu0 0.0
    %191 = vmatpush1.msra.mxu0 %v157
    %192 = vmatprep.subr.mxu0 0.0
    %193 = vmatpush1.msra.mxu0 %v158
    %194 = vmatprep.subr.mxu0 0.0
    %195 = vmatpush1.msra.mxu0 %v159
    %196 = vmatprep.subr.mxu0 0.0
    %197 = vmatpush1.msra.mxu0 %v160
    %198 = vmatprep.subr.mxu0 0.0
    %199 = vmatpush1.msra.mxu0 %v161
    %200 = vmatprep.subr.mxu0 0.0
    %201 = vmatpush1.msra.mxu0 %v162
    %202 = vmatprep.subr.mxu0 0.0
    %203 = vmatpush1.msra.mxu0 %v163
    %204 = vmatprep.subr.mxu0 0.0
    %205 = vmatpush1.msra.mxu0 %v164
    %206 = vmatprep.subr.mxu0 0.0
    %207 = vmatpush1.msra.mxu0 %v165
    %208 = vmatprep.subr.mxu0 0.0
    %209 = vmatpush1.msra.mxu0 %v166
    %210 = vmatprep.subr.mxu0 0.0
    %211 = vmatpush1.msra.mxu0 %v167
    %212 = vmatprep.subr.mxu0 0.0
    %213 = vmatpush1.msra.mxu0 %v168
    %214 = vmatprep.subr.mxu0 0.0
    %215 = vmatpush1.msra.mxu0 %v169
    %216 = vmatprep.subr.mxu0 0.0
    %217 = vmatpush1.msra.mxu0 %v170
    %218 = vmatprep.subr.mxu0 0.0
    %219 = vmatpush1.msra.mxu0 %v171
    %220 = vmatprep.subr.mxu0 0.0
    %221 = vmatpush1.msra.mxu0 %v172
    %222 = vmatprep.subr.mxu0 0.0
    %223 = vmatpush1.msra.mxu0 %v173
    %224 = vmatprep.subr.mxu0 0.0
    %225 = vmatpush1.msra.mxu0 %v174
    %226 = vmatprep.subr.mxu0 0.0
    %227 = vmatpush1.msra.mxu0 %v175
    %228 = vmatprep.subr.mxu0 0.0
    %229 = vmatpush1.msra.mxu0 %v176
    %230 = vmatprep.subr.mxu0 0.0
    %231 = vmatpush1.msra.mxu0 %v177
    %232 = vmatprep.subr.mxu0 0.0
    %233 = vmatpush1.msra.mxu0 %v178
    %234 = vmatprep.subr.mxu0 0.0
    %235 = vmatpush1.msra.mxu0 %v179
    %236 = vmatprep.subr.mxu0 0.0
    %237 = vmatpush1.msra.mxu0 %v180
    %238 = vmatprep.subr.mxu0 0.0
    %239 = vmatpush1.msra.mxu0 %v181
    %240 = vmatprep.subr.mxu0 0.0
    %241 = vmatpush1.msra.mxu0 %v182
    %242 = vmatprep.subr.mxu0 0.0
    %243 = vmatpush1.msra.mxu0 %v183
    %244 = vmatprep.subr.mxu0 0.0
    %245 = vmatpush1.msra.mxu0 %v184
    %246 = vmatprep.subr.mxu0 0.0
    %247 = vmatpush1.msra.mxu0 %v185
    %248 = vmatprep.subr.mxu0 0.0
    %249 = vmatpush1.msra.mxu0 %v186
    %250 = vmatprep.subr.mxu0 0.0
    %251 = vmatpush1.msra.mxu0 %v187
    %252 = vmatprep.mubr.f32.mxu0 %v50
    %253 = vmatmul.mubr.f32.gmra.mrb[0].mxu0 %v49
    %v254 = vpop.f32.mrb[0].mxu0
    %v255 = vadd.f32 0.0, %v254
    %v256 = vpop.f32.mrb[0].mxu0
    %257 = vdwg.mxu0
    %v259 = vlaneseq
    %v260 = vshrl.u32 %v259, 7
    %v261 = vsub.s32 0, %v260
    %v262 = vrot.slane %v87, %v261
    %v264 = vmul.f32 %v262, %v255
    %v265 = vld [vmem:[#allocation7] sm:$0xff]
    %v266 = vadd.f32 %v265, %v264
    %267 = vst [vmem:[#allocation7] sm:$0xff] %v266
    // Predicated region
    $region26: #{tpu_custom_call.1} parent=1 // pred_check
      _
    $region27: #{tpu_custom_call.1} parent=1 // pred_check_branch
      %269 = sbr.rel (0) target = $region29
    $region28: #{tpu_custom_call.1} parent=1 // pred_region
      %s271 = ssub.s32 128, 128
      %272 = vsyncadd [#allocation4], %s271
      %s274 = sshll.u32 [#allocation7], 4
      %s275 = int_to_ptr.vmem [resolvable:$true] %s274
      %277 = dma.vmem_to_hbm [thread:$0]  %s275, 128, %s3, [#allocation4]
    $region29: #{tpu_custom_call.1} parent=1 // pred_fallthru
      _
    // Predicated region
    $region30: #{tpu_custom_call.1} parent=1 // pred_check
      _
    $region31: #{tpu_custom_call.1} parent=1 // pred_check_branch
      %279 = sbr.rel (0) target = $region33
    $region32: #{tpu_custom_call.1} parent=1 // pred_region
      %280 = dma.done [#allocation4], 128
    $region33: #{tpu_custom_call.1} parent=1 // pred_fallthru
      _
    %281 = vsyncpa [#allocation3], 1
    %282 = vsyncpa [#allocation6], 1
    %283 = vsyncpa [#allocation4], 1

</llo_original>
